<compile_context>
chip_gen: v7x
topology: tpu7x:2x2x1
jax: 0.10.0
libtpu: 0.0.40
codegen_flags: <defaults>
</compile_context>

<pallas_src>
import jax
import jax.numpy as jnp
from jax.experimental import pallas as pl
from jax.experimental.pallas import tpu as pltpu


def _two_hot_embed_kernel(idx_ref, tbl_ref, o_ref):
    # idx_ref : (T, 2) int32 -- col 0 = token id, col 1 = V + position id
    # tbl_ref : (K, D)       -- VMEM-resident [tok_table; pos_table; zero-pad]
    # o_ref   : (T, D)       -- output tile
    T = o_ref.shape[0]
    K = tbl_ref.shape[0]

    idx = idx_ref[...]                      # (T, 2)
    tok_idx = idx[:, 0:1]                   # (T, 1)
    pos_idx = idx[:, 1:2]                   # (T, 1), already offset by V

    iota = jax.lax.broadcasted_iota(jnp.int32, (T, K), 1)
    # Exactly one match per column range (tok in [0,V), pos in [V,V+L)), so the
    # single matmul computes tok_row + pos_row in one pass.
    two_hot = ((iota == tok_idx) | (iota == pos_idx)).astype(tbl_ref.dtype)

    rows = jnp.dot(two_hot, tbl_ref[...], preferred_element_type=jnp.float32)
    o_ref[...] = rows.astype(o_ref.dtype)


def transformer_positional_embedding(token_ids, pos_ids, tok_table, pos_table,
                                     *, max_tile=1024):
    """token_ids, pos_ids: [B, S] int; tables: [V, D], [L, D].

    Returns [B, S, D] = tok_table[token_ids] + pos_table[pos_ids].
    """
    B, S = token_ids.shape
    V, D = tok_table.shape
    L, D2 = pos_table.shape
    assert D == D2, "embedding dims must match"
    n = B * S

    out_dtype = jnp.result_type(tok_table.dtype, pos_table.dtype)

    # Fused table: [tok_table; pos_table], rows zero-padded to a multiple of 128
    # so the two-hot contraction dim is lane-dense.
    K = max(128, ((V + L + 127) // 128) * 128)
    table = jnp.zeros((K, D), out_dtype)
    table = table.at[:V].set(tok_table.astype(out_dtype))
    table = table.at[V:V + L].set(pos_table.astype(out_dtype))

    # Row tile: multiple of 8 sublanes, capped at max_tile, and sized so the
    # grid has >= 2 steps (lets "parallel" shard across v7x's 2 TensorCores).
    half = (n + 1) // 2
    T = min(max_tile, max(8, ((half + 7) // 8) * 8))
    num_tiles = pl.cdiv(n, T)
    n_pad = num_tiles * T

    # Pack indices: (n_pad, 2), positions pre-offset by V.  Clamp (take-style).
    tok_flat = jnp.clip(token_ids.reshape(n).astype(jnp.int32), 0, V - 1)
    pos_flat = jnp.clip(pos_ids.reshape(n).astype(jnp.int32), 0, L - 1) + V
    idx = jnp.stack([tok_flat, pos_flat], axis=-1)          # (n, 2)
    if n_pad != n:
        idx = jnp.pad(idx, ((0, n_pad - n), (0, 0)))

    itemsize = jnp.dtype(out_dtype).itemsize
    cost = pl.CostEstimate(
        flops=2 * n_pad * K * D,
        transcendentals=0,
        bytes_accessed=n_pad * D * itemsize + n_pad * 2 * 4 + K * D * itemsize,
    )

    out_flat = pl.pallas_call(
        _two_hot_embed_kernel,
        out_shape=jax.ShapeDtypeStruct((n_pad, D), out_dtype),
        grid=(num_tiles,),
        in_specs=[
            pl.BlockSpec((T, 2), lambda i: (i, 0)),   # packed index tile
            pl.BlockSpec((K, D), lambda i: (0, 0)),   # resident fused table
        ],
        out_specs=pl.BlockSpec((T, D), lambda i: (i, 0)),
        compiler_params=pltpu.CompilerParams(
            dimension_semantics=("parallel",),
        ),
        cost_estimate=cost,
    )(idx, table)

    if n_pad != n:
        out_flat = out_flat[:n]
    return out_flat.reshape(B, S, D)


def _reference(token_ids, pos_ids, tok_table, pos_table):
    return jnp.take(tok_table, token_ids, axis=0) + jnp.take(
        pos_table, pos_ids, axis=0
    )


if __name__ == "__main__":
    # Small shapes consistent with the module:
    # nn.Embedding(d_model, embed_dense) + nn.Embedding(max_len, embed_dense).
    vocab = 32          # token-embedding vocabulary size
    max_len = 64        # maximum sequence length (position table rows)
    embed_dense = 128   # embedding dimension (lane-aligned)
    B, S = 2, 8

    key = jax.random.PRNGKey(0)
    k_tok, k_pos, k_ids = jax.random.split(key, 3)

    # Deterministic "weights" (nn.Embedding weight tables).
    tok_table = jax.random.normal(k_tok, (vocab, embed_dense), dtype=jnp.float32)
    pos_table = jax.random.normal(k_pos, (max_len, embed_dense), dtype=jnp.float32)

    # Inputs: token ids [B, S]; positions are arange(S) broadcast over batch.
    token_ids = jax.random.randint(k_ids, (B, S), 0, vocab, dtype=jnp.int32)
    pos_ids = jnp.broadcast_to(jnp.arange(S, dtype=jnp.int32)[None, :], (B, S))

    out = transformer_positional_embedding(token_ids, pos_ids, tok_table, pos_table)
    out = jax.block_until_ready(out)

    ref = _reference(token_ids, pos_ids, tok_table, pos_table)
    assert out.shape == (B, S, embed_dense)
    assert jnp.allclose(out, ref, atol=1e-5, rtol=1e-5)

    print("KERNEL_OK")
</pallas_src>

<mosaic_0001>
module attributes {stable_mosaic.version = 11 : i64} {
  func.func @_two_hot_embed_kernel(%arg0: i32, %arg1: memref<8x2xi32, #tpu.memory_space<vmem>>, %arg2: memref<128x128xf32, #tpu.memory_space<vmem>>, %arg3: memref<8x128xf32, #tpu.memory_space<vmem>>) attributes {dimension_semantics = [#tpu.dimension_semantics<parallel>], iteration_bounds = array<i64: 2>, scalar_prefetch = 0 : i64, scratch_operands = 0 : i64, tpu.core_type = #tpu.core_type<tc>, window_params = [{transform_indices = @transform_0, window_bounds = array<i64: 8, 2>}, {pipeline_mode = #tpu.pipeline_mode<synchronous>, transform_indices = @transform_1, window_bounds = array<i64: 128, 128>}, {transform_indices = @transform_2, window_bounds = array<i64: 8, 128>}]} {
    %c0 = arith.constant 0 : index
    %c0_0 = arith.constant 0 : index
    %0 = vector.load %arg1[%c0, %c0_0] : memref<8x2xi32, #tpu.memory_space<vmem>>, vector<8x2xi32>
    %1 = vector.extract_strided_slice %0 {offsets = [0, 0], sizes = [8, 1], strides = [1, 1]} : vector<8x2xi32> to vector<8x1xi32>
    %2 = vector.extract_strided_slice %0 {offsets = [0, 1], sizes = [8, 1], strides = [1, 1]} : vector<8x2xi32> to vector<8x1xi32>
    %3 = tpu.iota {dimensions = array<i32: 1>} : vector<8x128xi32>
    %4 = vector.broadcast %1 : vector<8x1xi32> to vector<8x128xi32>
    %5 = arith.cmpi eq, %3, %4 : vector<8x128xi32>
    %6 = vector.broadcast %2 : vector<8x1xi32> to vector<8x128xi32>
    %7 = arith.cmpi eq, %3, %6 : vector<8x128xi32>
    %8 = arith.ori %5, %7 : vector<8x128xi1>
    %9 = arith.extui %8 : vector<8x128xi1> to vector<8x128xi32>
    %10 = arith.sitofp %9 : vector<8x128xi32> to vector<8x128xf32>
    %c0_1 = arith.constant 0 : index
    %c0_2 = arith.constant 0 : index
    %11 = vector.load %arg2[%c0_1, %c0_2] : memref<128x128xf32, #tpu.memory_space<vmem>>, vector<128x128xf32>
    %cst = arith.constant dense<0.000000e+00> : vector<8x128xf32>
    %12 = tpu.matmul %10, %11, %cst {dimension_numbers = #tpu.dot_dimension_numbers<[1], [0], [0], [1], [0, 0, 1, 1], [], []>} : vector<8x128xf32>, vector<128x128xf32>, vector<8x128xf32> -> vector<8x128xf32>
    %c0_3 = arith.constant 0 : index
    %c0_4 = arith.constant 0 : index
    %13 = vector.load %arg3[%c0_3, %c0_4] : memref<8x128xf32, #tpu.memory_space<vmem>>, vector<8x128xf32>
    tpu.vector_store %arg3[%c0_3, %c0_4], %12 {strides = array<i32>} : memref<8x128xf32, #tpu.memory_space<vmem>>, vector<8x128xf32>,
    return
  }
  func.func @transform_0(%arg0: i32) -> (i32, i32) {
    %c0_i32 = arith.constant 0 : i32
    %c0_i32_0 = arith.constant 0 : i32
    return %arg0, %c0_i32 : i32, i32
  }
  func.func @transform_1(%arg0: i32) -> (i32, i32) {
    %c0_i32 = arith.constant 0 : i32
    %c0_i32_0 = arith.constant 0 : i32
    %c0_i32_1 = arith.constant 0 : i32
    return %c0_i32, %c0_i32_0 : i32, i32
  }
  func.func @transform_2(%arg0: i32) -> (i32, i32) {
    %c0_i32 = arith.constant 0 : i32
    %c0_i32_0 = arith.constant 0 : i32
    return %arg0, %c0_i32 : i32, i32
  }
}

</mosaic_0001>

<llo_original>
// kernel: tpu_custom_call.1
$region0: #{tpu_custom_call.1}
  #allocation0 [shape = 'u32[]', space=smem, size = 0x4, offset = 0x4, fixed_abs, tag = 'smem constant byte address 0x4 - core index']
  #allocation1 [shape = 'u32[144,128]{1,0:T(1,128)}', space=vmem, size = 0x12000, scoped, tag = 'internal scratch']
  %s0 = inlined_call_operand.vmem [shape: s32[16,2], index: 0, kind: input, shape index: {}]
  %s1 = inlined_call_operand.hbm [shape: f32[128,128], index: 1, kind: input, shape index: {}]
  %s2 = inlined_call_operand.hbm [shape: f32[16,128], index: 2, kind: output, shape index: {}]
  %s3 = sld [smem:[#allocation0]]
  $region45: #{tpu_custom_call.1} parent=0
    _
  %s5 = ssub.s32 1, %s3
  %s6 = scalar_select 0, %s5, %s3
  $region1: #{tpu_custom_call.1} parent=0
    #allocation2 [shape = 'u8[65536]{0}', space=vmem, size = 0x10000, scoped, tag = 'input window, operand 1, single buffered']
    #allocation3 [shape = 's32[2]{0}', space=sflag, size = 0x8, scoped, tag = 'scoped memory for tpu_custom_call.1']
    #allocation4 [shape = 's32[2]{0}', space=sflag, size = 0x8, scoped, tag = 'scoped memory for tpu_custom_call.1']
    #allocation5 [shape = 'u8[8192]{0}', space=vmem, size = 0x2000, scoped, tag = 'output window, operand 0']
    %7 = vsyncpa [#allocation3], 0
    %8 = vsyncpa [#allocation4], 0
    %s9 = scalar_lea.sflag [#allocation4], 1
    %10 = vsyncpa %s9, 0
    loop: start=0, step=1, limit=4
    $region2: #{tpu_custom_call.1} parent=1 // loop_pre_header
      _
    $region3: #{tpu_custom_call.1} parent=1 // loop_header
      %s12 = sphi 0, %s16
      %p13 = scmp.ge.s32.totalorder %s12, 4
      %s22 = sphi 0, %s24
      %s25 = sphi 0, %s22
      %s26 = sphi 0, %s25
      %s42 = sphi 0, %s26
      %s46 = sphi 0, %s46
      %s48 = sphi 0, %s46
      %s49 = sphi 0, %s48
      %s63 = sphi 0, %s49
      %s69 = sphi 0, %s71
      %s72 = sphi 0, %s69
      %s73 = sphi 0, %s72
      %s89 = sphi 0, %s73
    $region4: #{tpu_custom_call.1} parent=1 // loop_header_branch
      %15 = sbr.rel (%p13) target = $region8
    $region5: #{tpu_custom_call.1} parent=1 // loop_body
      %s17 = ssub.s32 %s12, 1
      %s18 = ssub.s32 %s12, 2
      %s19 = sadd.s32 %s12, 1
      %s20 = ssub.s32 %s12, %s19
      %p21 = scmp.eq.s32.totalorder %s20, 0
      %s23 = sadd.s32 %s22, 1
      %s24 = scalar_select %p21, %s22, %s23
      %p27 = pneg %p21
      %p28 = scmp.eq.s32.totalorder %s12, 1
      %p29 = por %p27, %p28
      %p30 = scmp.ne.s32.totalorder %s22, %s25
      %p31 = scmp.eq.s32.totalorder %s12, 0
      %p32 = por %p30, %p31
      %p33 = scmp.ne.s32.totalorder %s22, %s25
      %p34 = scmp.eq.s32.totalorder %s17, 1
      %p35 = por %p33, %p34
      %p36 = scmp.ne.s32.totalorder %s25, %s26
      %p37 = scmp.eq.s32.totalorder %s17, 0
      %p38 = por %p36, %p37
      %p39 = scmp.ne.s32.totalorder %s25, %s26
      %p40 = scmp.eq.s32.totalorder %s18, 1
      %p41 = por %p39, %p40
      %p43 = scmp.ne.s32.totalorder %s26, %s42
      %p44 = scmp.eq.s32.totalorder %s18, 0
      %p45 = por %p43, %p44
      %s47 = sadd.s32 %s46, 1
      %p50 = scmp.eq.s32.totalorder %s12, 1
      %p51 = scmp.ne.s32.totalorder %s46, %s48
      %p52 = scmp.eq.s32.totalorder %s12, 0
      %p53 = por %p51, %p52
      %p54 = scmp.ne.s32.totalorder %s46, %s48
      %p55 = scmp.eq.s32.totalorder %s17, 1
      %p56 = por %p54, %p55
      %p57 = scmp.ne.s32.totalorder %s48, %s49
      %p58 = scmp.eq.s32.totalorder %s17, 0
      %p59 = por %p57, %p58
      %p60 = scmp.ne.s32.totalorder %s48, %s49
      %p61 = scmp.eq.s32.totalorder %s18, 1
      %p62 = por %p60, %p61
      %p64 = scmp.ne.s32.totalorder %s49, %s63
      %p65 = scmp.eq.s32.totalorder %s18, 0
      %p66 = por %p64, %p65
      %s67 = ssub.s32 %s12, %s19
      %p68 = scmp.eq.s32.totalorder %s67, 0
      %s70 = sadd.s32 %s69, 1
      %s71 = scalar_select %p68, %s69, %s70
      %p74 = pneg %p68
      %p75 = scmp.eq.s32.totalorder %s12, 1
      %p76 = por %p74, %p75
      %p77 = scmp.ne.s32.totalorder %s69, %s72
      %p78 = scmp.eq.s32.totalorder %s12, 0
      %p79 = por %p77, %p78
      %p80 = scmp.ne.s32.totalorder %s69, %s72
      %p81 = scmp.eq.s32.totalorder %s17, 1
      %p82 = por %p80, %p81
      %p83 = scmp.ne.s32.totalorder %s72, %s73
      %p84 = scmp.eq.s32.totalorder %s17, 0
      %p85 = por %p83, %p84
      %p86 = scmp.ne.s32.totalorder %s72, %s73
      %p87 = scmp.eq.s32.totalorder %s18, 1
      %p88 = por %p86, %p87
      %p90 = scmp.ne.s32.totalorder %s73, %s89
      %p91 = scmp.eq.s32.totalorder %s18, 0
      %p92 = por %p90, %p91
      %p93 = scmp.le.s32.totalorder 1, %s12
      %p94 = scmp.lt.s32.totalorder %s12, 3
      %p95 = pnand %p93, %p94
      %p96 = pneg %p95
      // Predicated region
      $region9: #{tpu_custom_call.1} parent=5 // pred_check
        _
      $region10: #{tpu_custom_call.1} parent=5 // pred_check_branch
        %98 = sbr.rel (%p95) target = $region12
      $region11: #{tpu_custom_call.1} parent=5 // pred_region
        %s99 = ssub.s32 %s12, 1
        // Predicated region
        $region13: #{tpu_custom_call.1} parent=11 // pred_check
          %p100 = pneg %p59
        $region14: #{tpu_custom_call.1} parent=11 // pred_check_branch
          %102 = sbr.rel (%p100) target = $region16
        $region15: #{tpu_custom_call.1} parent=11 // pred_region
          %s104 = ssub.s32 2048, 2048
          %105 = vsyncadd [#allocation3], %s104
          %s106 = sshll.u32 [#allocation2], 4
          %s107 = int_to_ptr.vmem [resolvable:$true] %s106
          %112 = dma.hbm_to_vmem [thread:$0]  %s1, 2048, %s107, [#allocation3], 128, 128, 8
        $region16: #{tpu_custom_call.1} parent=11 // pred_fallthru
          _
      $region12: #{tpu_custom_call.1} parent=5 // pred_fallthru
        _
      %p113 = scmp.lt.s32.totalorder %s12, 2
      // Predicated region
      $region17: #{tpu_custom_call.1} parent=5 // pred_check
        %p114 = pneg %p113
      $region18: #{tpu_custom_call.1} parent=5 // pred_check_branch
        %116 = sbr.rel (%p114) target = $region20
      $region19: #{tpu_custom_call.1} parent=5 // pred_region
        // Predicated region
        $region21: #{tpu_custom_call.1} parent=19 // pred_check
          %p117 = pneg %p32
        $region22: #{tpu_custom_call.1} parent=19 // pred_check_branch
          %119 = sbr.rel (%p117) target = $region24
        $region23: #{tpu_custom_call.1} parent=19 // pred_region
          %p120 = scmp.lt.s32.totalorder %s12, 1
          %s121 = scalar_select %p120, %s12, 1
          %s122 = smul.addr %s121, 8
          %s123 = scalar_lea.vmem %s0, %s122
        $region24: #{tpu_custom_call.1} parent=19 // pred_fallthru
          _
      $region20: #{tpu_custom_call.1} parent=5 // pred_fallthru
        _
      %p124 = scmp.le.s32.totalorder 1, %s12
      %p125 = scmp.lt.s32.totalorder %s12, 3
      %p126 = pnand %p124, %p125
      %p127 = pneg %p126
      // Predicated region
      $region25: #{tpu_custom_call.1} parent=5 // pred_check
        _
      $region26: #{tpu_custom_call.1} parent=5 // pred_check_branch
        %129 = sbr.rel (%p126) target = $region28
      $region27: #{tpu_custom_call.1} parent=5 // pred_region
        %s130 = ssub.s32 %s12, 1
        // Predicated region
        $region29: #{tpu_custom_call.1} parent=27 // pred_check
          %p131 = pneg %p59
        $region30: #{tpu_custom_call.1} parent=27 // pred_check_branch
          %133 = sbr.rel (%p131) target = $region32
        $region31: #{tpu_custom_call.1} parent=27 // pred_region
          %134 = dma.done [#allocation3], 2048
        $region32: #{tpu_custom_call.1} parent=27 // pred_fallthru
          _
        %p135 = scmp.lt.s32.totalorder %s17, 1
        %s136 = scalar_select %p135, %s17, 1
        %s137 = smul.addr %s136, 8
        %s138 = scalar_lea.vmem %s0, %s137
        %p139 = pneg %p38
        %p140 = pneg %p35
        %p141 = pneg %p59
        %p142 = pneg %p56
        %p143 = pneg %p85
        %p144 = pneg %p82
        %s145 = sand.u32 %s72, 1
        %s146 = scalar_lea.sflag [#allocation4], %s145
        %s147 = sand.u32 %s72, 1
        %s148 = smul.addr %s147, 8
        %s149 = scalar_lea.vmem [#allocation5], %s148
        %p150 = scmp.lt.s32.totalorder %s17, 1
        %s151 = scalar_select %p150, %s17, 1
        %s152 = smul.addr %s151, 8
        %s153 = scalar_lea.vmem %s0, %s152
        %v154 = vld [vmem:[%s153] sm:$0xff]
        %v155 = vlaneseq
        %v156 = vand.u32 %v155, 127
        %157 = vset.pattern.permute.xlu0 0
        %158 = vperm.xlu0 %157, %v154
        %v159 = vpop.permute.xlu0 %158
        %vm160 = vcmp.eq.s32.totalorder %v156, %v159
        %161 = vset.pattern.permute.xlu0 1
        %162 = vperm.xlu0 %161, %v154
        %v163 = vpop.permute.xlu0 %162
        %vm164 = vcmp.eq.s32.totalorder %v156, %v163
        %vm165 = vmor %vm160, %vm164
        %v166 = vsel %vm165, 1, 0
        %v167 = vcvt.s32.f32 %v166
        %v168 = vld [vmem:[#allocation2] sm:$0xff]
        %v169 = vld [vmem:[#allocation2 + $0x8] sm:$0xff]
        %v170 = vld [vmem:[#allocation2 + $0x10] sm:$0xff]
        %v171 = vld [vmem:[#allocation2 + $0x18] sm:$0xff]
        %v172 = vld [vmem:[#allocation2 + $0x20] sm:$0xff]
        %v173 = vld [vmem:[#allocation2 + $0x28] sm:$0xff]
        %v174 = vld [vmem:[#allocation2 + $0x30] sm:$0xff]
        %v175 = vld [vmem:[#allocation2 + $0x38] sm:$0xff]
        %v176 = vld [vmem:[#allocation2 + $0x40] sm:$0xff]
        %v177 = vld [vmem:[#allocation2 + $0x48] sm:$0xff]
        %v178 = vld [vmem:[#allocation2 + $0x50] sm:$0xff]
        %v179 = vld [vmem:[#allocation2 + $0x58] sm:$0xff]
        %v180 = vld [vmem:[#allocation2 + $0x60] sm:$0xff]
        %v181 = vld [vmem:[#allocation2 + $0x68] sm:$0xff]
        %v182 = vld [vmem:[#allocation2 + $0x70] sm:$0xff]
        %v183 = vld [vmem:[#allocation2 + $0x78] sm:$0xff]
        %184 = vmatprep.subr.mxu0 0.0
        %185 = vmatpush1.msra.mxu0 %v168
        %186 = vmatprep.subr.mxu0 0.0
        %187 = vmatpush1.msra.mxu0 %v169
        %188 = vmatprep.subr.mxu0 0.0
        %189 = vmatpush1.msra.mxu0 %v170
        %190 = vmatprep.subr.mxu0 0.0
        %191 = vmatpush1.msra.mxu0 %v171
        %192 = vmatprep.subr.mxu0 0.0
        %193 = vmatpush1.msra.mxu0 %v172
        %194 = vmatprep.subr.mxu0 0.0
        %195 = vmatpush1.msra.mxu0 %v173
        %196 = vmatprep.subr.mxu0 0.0
        %197 = vmatpush1.msra.mxu0 %v174
        %198 = vmatprep.subr.mxu0 0.0
        %199 = vmatpush1.msra.mxu0 %v175
        %200 = vmatprep.subr.mxu0 0.0
        %201 = vmatpush1.msra.mxu0 %v176
        %202 = vmatprep.subr.mxu0 0.0
        %203 = vmatpush1.msra.mxu0 %v177
        %204 = vmatprep.subr.mxu0 0.0
        %205 = vmatpush1.msra.mxu0 %v178
        %206 = vmatprep.subr.mxu0 0.0
        %207 = vmatpush1.msra.mxu0 %v179
        %208 = vmatprep.subr.mxu0 0.0
        %209 = vmatpush1.msra.mxu0 %v180
        %210 = vmatprep.subr.mxu0 0.0
        %211 = vmatpush1.msra.mxu0 %v181
        %212 = vmatprep.subr.mxu0 0.0
        %213 = vmatpush1.msra.mxu0 %v182
        %214 = vmatprep.subr.mxu0 0.0
        %215 = vmatpush1.msra.mxu0 %v183
        %216 = vmatprep.subr.mxu0 0.0
        %217 = vmatpush1.msra.mxu0 0.0
        %218 = vmatprep.subr.mxu0 0.0
        %219 = vmatpush1.msra.mxu0 0.0
        %220 = vmatprep.subr.mxu0 0.0
        %221 = vmatpush1.msra.mxu0 0.0
        %222 = vmatprep.subr.mxu0 0.0
        %223 = vmatpush1.msra.mxu0 0.0
        %224 = vmatprep.subr.mxu0 0.0
        %225 = vmatpush1.msra.mxu0 0.0
        %226 = vmatprep.subr.mxu0 0.0
        %227 = vmatpush1.msra.mxu0 0.0
        %228 = vmatprep.subr.mxu0 0.0
        %229 = vmatpush1.msra.mxu0 0.0
        %230 = vmatprep.subr.mxu0 0.0
        %231 = vmatpush1.msra.mxu0 0.0
        %232 = vmatprep.subr.mxu0 0.0
        %233 = vmatpush1.msra.mxu0 0.0
        %234 = vmatprep.subr.mxu0 0.0
        %235 = vmatpush1.msra.mxu0 0.0
        %236 = vmatprep.subr.mxu0 0.0
        %237 = vmatpush1.msra.mxu0 0.0
        %238 = vmatprep.subr.mxu0 0.0
        %239 = vmatpush1.msra.mxu0 0.0
        %240 = vmatprep.subr.mxu0 0.0
        %241 = vmatpush1.msra.mxu0 0.0
        %242 = vmatprep.subr.mxu0 0.0
        %243 = vmatpush1.msra.mxu0 0.0
        %244 = vmatprep.subr.mxu0 0.0
        %245 = vmatpush1.msra.mxu0 0.0
        %246 = vmatprep.subr.mxu0 0.0
        %247 = vmatpush1.msra.mxu0 0.0
        %248 = vmatprep.mubr.f32.mxu0 0.0
        %249 = vmatmul.mubr.f32.gmra.mrb[0].mxu0 %v167
        %v250 = vpop.f32.mrb[0].mxu0
        %v251 = vadd.f32 0.0, %v250
        %v252 = vpop.f32.mrb[0].mxu0
        %253 = vdwg.mxu0
        %254 = vst [vmem:[%s149] sm:$0xff] %v251
        %s255 = sand.u32 %s72, 1
        %s256 = scalar_lea.sflag [#allocation4], %s255
        %s257 = sand.u32 %s72, 1
        %s258 = smul.addr %s257, 8
        %s259 = scalar_lea.vmem [#allocation5], %s258
        // Predicated region
        $region33: #{tpu_custom_call.1} parent=27 // pred_check
          %p260 = pneg %p82
        $region34: #{tpu_custom_call.1} parent=27 // pred_check_branch
          %262 = sbr.rel (%p260) target = $region36
        $region35: #{tpu_custom_call.1} parent=27 // pred_region
          %s264 = ssub.s32 128, 128
          %265 = vsyncadd %s256, %s264
          %s266 = smul.addr %s17, 128
          %s267 = scalar_lea.hbm %s2, %s266
          %s269 = sshll.u32 %s259, 4
          %s270 = int_to_ptr.vmem [resolvable:$true] %s269
          %272 = dma.vmem_to_hbm [thread:$0]  %s270, 128, %s267, %s256
        $region36: #{tpu_custom_call.1} parent=27 // pred_fallthru
          _
      $region28: #{tpu_custom_call.1} parent=5 // pred_fallthru
        _
      %p273 = scmp.le.s32.totalorder 2, %s12
      // Predicated region
      $region37: #{tpu_custom_call.1} parent=5 // pred_check
        %p274 = pneg %p273
      $region38: #{tpu_custom_call.1} parent=5 // pred_check_branch
        %276 = sbr.rel (%p274) target = $region40
      $region39: #{tpu_custom_call.1} parent=5 // pred_region
        %s277 = ssub.s32 %s12, 2
        // Predicated region
        $region41: #{tpu_custom_call.1} parent=39 // pred_check
          %p278 = pneg %p88
        $region42: #{tpu_custom_call.1} parent=39 // pred_check_branch
          %280 = sbr.rel (%p278) target = $region44
        $region43: #{tpu_custom_call.1} parent=39 // pred_region
          %s281 = sand.u32 %s73, 1
          %s282 = scalar_lea.sflag [#allocation4], %s281
          %s283 = sand.u32 %s73, 1
          %s284 = smul.addr %s283, 8
          %s285 = scalar_lea.vmem [#allocation5], %s284
          %286 = dma.done %s282, 128
        $region44: #{tpu_custom_call.1} parent=39 // pred_fallthru
          _
      $region40: #{tpu_custom_call.1} parent=5 // pred_fallthru
        _
    $region6: #{tpu_custom_call.1} parent=1 // loop_footer
      %s16 = sadd.s32 1, %s12
    $region7: #{tpu_custom_call.1} parent=1 // loop_footer_branch
      %11 = sbr.rel target = $region3
    $region8: #{tpu_custom_call.1} parent=1 // loop_exit
      _
    %287 = vsyncpa [#allocation3], 1
    %s288 = scalar_lea.sflag [#allocation3], 1
    %289 = vsyncpa %s288, 1
    %290 = vsyncpa [#allocation4], 1
    %s291 = scalar_lea.sflag [#allocation4], 1
    %292 = vsyncpa %s291, 1

</llo_original>
